<compile_context>
chip_gen: v6e
topology: v6e:2x2x1
jax: 0.10.0
libtpu: 0.0.40
codegen_flags: <defaults>
</compile_context>

<pallas_src>
import functools
import math

import jax
import jax.numpy as jnp
from jax.experimental import pallas as pl
from jax.experimental.pallas import tpu as pltpu

COMPUTE_DTYPE = jnp.bfloat16   # MXU / streamed-activation dtype (stats stay f32)
ROW_BLOCK_TARGET = 256         # MXU-friendly row tile (use 128 if tuning for v5e)
LN_EPS = 1e-12                 # BERT LayerNorm eps
L2_EPS = 1e-12                 # torch.nn.functional.normalize eps


# ---------------------------------------------------------------------------
# Small helpers
# ---------------------------------------------------------------------------
def _row_block(m, target=ROW_BLOCK_TARGET):
    """Fixed MXU-aligned row tile; small M rounds up to a multiple of 8."""
    if m >= target:
        return target
    return m if m % 8 == 0 else ((m + 7) // 8) * 8


def _inv_spec(shape):
    """BlockSpec for a grid-invariant operand: constant index_map, single buffer."""
    index_map = lambda *_: (0,) * len(shape)
    if hasattr(pl, "Buffered"):
        try:
            return pl.BlockSpec(shape, index_map, pipeline_mode=pl.Buffered(1))
        except TypeError:
            pass
    return pl.BlockSpec(shape, index_map)


def _cparams(semantics, stream_bytes, resident_bytes):
    """CompilerParams with an explicit scoped-VMEM budget (headroom, v7x-capped)."""
    est = 2 * int(stream_bytes) + int(resident_bytes) + (8 << 20)
    limit = min(max(est, 32 << 20), 60 << 20)
    return pltpu.CompilerParams(dimension_semantics=semantics,
                                vmem_limit_bytes=limit)


def _gelu_f32(y):
    # erf-based GELU (BERT default hidden_act="gelu"), computed in f32.
    return 0.5 * y * (1.0 + jax.lax.erf(y * 0.7071067811865476))


# ---------------------------------------------------------------------------
# Pallas kernels
# ---------------------------------------------------------------------------
def _linear_kernel(x_ref, w_ref, b_ref, o_ref, *, l2_in, l2_out, eps):
    """y = (l2norm?(x)) @ W + b, optional L2-normalize of the output."""
    x = x_ref[...]
    if l2_in:
        xf = x.astype(jnp.float32)
        n = jnp.sqrt(jnp.sum(xf * xf, axis=-1, keepdims=True))
        x = (xf / jnp.maximum(n, eps)).astype(x_ref.dtype)
    y = jnp.dot(x, w_ref[...], preferred_element_type=jnp.float32) + b_ref[...]
    if l2_out:
        n = jnp.sqrt(jnp.sum(y * y, axis=-1, keepdims=True))
        y = y / jnp.maximum(n, eps)
    o_ref[...] = y.astype(o_ref.dtype)


def linear(x, w, b, *, l2norm_in=False, l2norm_out=False, out_dtype=None):
    """x: (M, K) @ w: (K, N) + b, with optional fused L2-normalize (in or out)."""
    M, K = x.shape
    Kw, N = w.shape
    assert K == Kw
    rb = _row_block(M)
    out_dtype = x.dtype if out_dtype is None else out_dtype
    kern = functools.partial(_linear_kernel, l2_in=l2norm_in, l2_out=l2norm_out,
                             eps=L2_EPS)
    stream = rb * (K * x.dtype.itemsize + N * jnp.dtype(out_dtype).itemsize)
    resident = K * N * w.dtype.itemsize + N * 4
    return pl.pallas_call(
        kern,
        out_shape=jax.ShapeDtypeStruct((M, N), out_dtype),
        grid=(pl.cdiv(M, rb),),
        in_specs=[
            pl.BlockSpec((rb, K), lambda i: (i, 0)),
            _inv_spec((K, N)),
            _inv_spec((1, N)),
        ],
        out_specs=pl.BlockSpec((rb, N), lambda i: (i, 0)),
        compiler_params=_cparams(("parallel",), stream, resident),
    )(x, w, b.reshape(1, N).astype(jnp.float32))


def _linear_add_ln_kernel(x_ref, w_ref, b_ref, r_ref, g_ref, bln_ref, o_ref, *, eps):
    """y = LayerNorm((x @ W + b) + residual) * gamma + beta (stats in f32)."""
    y = jnp.dot(x_ref[...], w_ref[...], preferred_element_type=jnp.float32)
    y = y + b_ref[...] + r_ref[...].astype(jnp.float32)
    mu = jnp.mean(y, axis=-1, keepdims=True)
    yc = y - mu
    var = jnp.mean(yc * yc, axis=-1, keepdims=True)
    y = yc * jax.lax.rsqrt(var + eps)
    o_ref[...] = (y * g_ref[...] + bln_ref[...]).astype(o_ref.dtype)


def linear_add_layernorm(x, w, b, residual, gamma, beta, eps=LN_EPS):
    """Fused Linear -> +residual -> LayerNorm over the last dim."""
    M, K = x.shape
    Kw, N = w.shape
    assert K == Kw and residual.shape == (M, N)
    rb = _row_block(M)
    kern = functools.partial(_linear_add_ln_kernel, eps=eps)
    stream = rb * (K + 2 * N) * x.dtype.itemsize
    resident = K * N * w.dtype.itemsize + 3 * N * 4
    return pl.pallas_call(
        kern,
        out_shape=jax.ShapeDtypeStruct((M, N), x.dtype),
        grid=(pl.cdiv(M, rb),),
        in_specs=[
            pl.BlockSpec((rb, K), lambda i: (i, 0)),
            _inv_spec((K, N)),
            _inv_spec((1, N)),
            pl.BlockSpec((rb, N), lambda i: (i, 0)),
            _inv_spec((1, N)),
            _inv_spec((1, N)),
        ],
        out_specs=pl.BlockSpec((rb, N), lambda i: (i, 0)),
        compiler_params=_cparams(("parallel",), stream, resident),
    )(x, w, b.reshape(1, N).astype(jnp.float32), residual,
      gamma.reshape(1, N), beta.reshape(1, N))


def _ffn_kernel(x_ref, w1_ref, b1_ref, w2_ref, b2_ref, g_ref, bln_ref, o_ref, *, eps):
    """LayerNorm(GELU(x @ W1 + b1) @ W2 + b2 + x): FFN intermediate stays in VMEM."""
    x = x_ref[...]
    h = jnp.dot(x, w1_ref[...], preferred_element_type=jnp.float32) + b1_ref[...]
    h = _gelu_f32(h)
    y = jnp.dot(h.astype(x.dtype), w2_ref[...],
                preferred_element_type=jnp.float32) + b2_ref[...]
    y = y + x.astype(jnp.float32)          # residual is the same block: no extra DMA
    mu = jnp.mean(y, axis=-1, keepdims=True)
    yc = y - mu
    var = jnp.mean(yc * yc, axis=-1, keepdims=True)
    y = yc * jax.lax.rsqrt(var + eps)
    o_ref[...] = (y * g_ref[...] + bln_ref[...]).astype(o_ref.dtype)


def ffn_add_layernorm(x, w1, b1, w2, b2, gamma, beta, eps=LN_EPS):
    """Fused FF1 + GELU + FF2 + residual + LayerNorm (x is also the residual)."""
    M, D = x.shape
    Dw, I = w1.shape
    assert D == Dw and w2.shape == (I, D)
    rb = _row_block(M)
    kern = functools.partial(_ffn_kernel, eps=eps)
    stream = rb * 2 * D * x.dtype.itemsize
    resident = 2 * D * I * w1.dtype.itemsize + (I + 3 * D) * 4 + rb * I * 4
    return pl.pallas_call(
        kern,
        out_shape=jax.ShapeDtypeStruct((M, D), x.dtype),
        grid=(pl.cdiv(M, rb),),
        in_specs=[
            pl.BlockSpec((rb, D), lambda i: (i, 0)),
            _inv_spec((D, I)),
            _inv_spec((1, I)),
            _inv_spec((I, D)),
            _inv_spec((1, D)),
            _inv_spec((1, D)),
            _inv_spec((1, D)),
        ],
        out_specs=pl.BlockSpec((rb, D), lambda i: (i, 0)),
        compiler_params=_cparams(("parallel",), stream, resident),
    )(x, w1, b1.reshape(1, I).astype(jnp.float32),
      w2, b2.reshape(1, D).astype(jnp.float32),
      gamma.reshape(1, D), beta.reshape(1, D))


def _embed_add_ln_kernel(x_ref, pt_ref, g_ref, b_ref, o_ref, *, eps):
    """LayerNorm(x + pos_emb + token_type_emb); (S, D) table broadcast per batch."""
    y = x_ref[...].astype(jnp.float32) + pt_ref[...]
    mu = jnp.mean(y, axis=-1, keepdims=True)
    yc = y - mu
    var = jnp.mean(yc * yc, axis=-1, keepdims=True)
    y = yc * jax.lax.rsqrt(var + eps)
    o_ref[...] = (y * g_ref[...] + b_ref[...]).astype(o_ref.dtype)


def embed_add_layernorm(x, pos_tok, gamma, beta, eps=LN_EPS):
    """x: (B, S, D); pos_tok: (S, D).  No (B*S, D) broadcast materialized in HBM."""
    B, S, D = x.shape
    kern = functools.partial(_embed_add_ln_kernel, eps=eps)
    stream = 2 * S * D * x.dtype.itemsize
    resident = S * D * 4 + 2 * D * 4
    return pl.pallas_call(
        kern,
        out_shape=jax.ShapeDtypeStruct((B, S, D), x.dtype),
        grid=(B,),
        in_specs=[
            pl.BlockSpec((None, S, D), lambda b: (b, 0, 0)),
            _inv_spec((S, D)),
            _inv_spec((1, D)),
            _inv_spec((1, D)),
        ],
        out_specs=pl.BlockSpec((None, S, D), lambda b: (b, 0, 0)),
        compiler_params=_cparams(("parallel",), stream, resident),
    )(x, pos_tok, gamma.reshape(1, D), beta.reshape(1, D))


def _attn_kernel(h_ref, w_ref, b_ref, bias_ref, o_ref, *, heads, head_dim, scale):
    """Fused QKV projection + all-heads self-attention for one batch element.

    h_ref:  (S, D) hidden states (lane-dense block).
    w_ref:  (D, 3D) fused Q|K|V weight (grid-invariant, single-buffered).
    b_ref:  (1, 3D) fused bias (f32).
    bias_ref: (1, S) additive key-mask bias (f32).
    o_ref:  (S, D) context, head-major column layout (matches HF reshape);
            written with a single full-width lane-dense store.
    """
    D = heads * head_dim
    cdt = h_ref.dtype
    qkv = jnp.dot(h_ref[...], w_ref[...],
                  preferred_element_type=jnp.float32) + b_ref[...]
    qkv_c = qkv.astype(cdt)
    bias = bias_ref[...]                                    # (1, S) f32
    ctxs = []
    for hh in range(heads):
        lo = hh * head_dim
        # fold 1/sqrt(dh) into Q (S*dh mults), not the (S, S) score matrix
        q = (qkv[:, lo:lo + head_dim] * scale).astype(cdt)
        k = qkv_c[:, D + lo:D + lo + head_dim]
        v = qkv_c[:, 2 * D + lo:2 * D + lo + head_dim]
        s = jax.lax.dot_general(q, k, (((1,), (1,)), ((), ())),
                                preferred_element_type=jnp.float32)
        s = s + bias                                        # broadcast over query rows
        s = s - jnp.max(s, axis=-1, keepdims=True)
        p = jnp.exp(s)
        p = p / jnp.sum(p, axis=-1, keepdims=True)          # exact softmax
        ctx = jax.lax.dot_general(p.astype(cdt), v, (((1,), (0,)), ((), ())),
                                  preferred_element_type=jnp.float32)
        ctxs.append(ctx)
    o_ref[...] = jnp.concatenate(ctxs, axis=-1).astype(o_ref.dtype)


def attention(h, qkv_w, qkv_b, mask_bias, heads):
    """h: (B, S, D) hidden; fused QKV projection + attention -> (B, S, D)."""
    B, S, D = h.shape
    dh = D // heads
    # TODO(synk): for long sequences add a query-row grid axis and tile the key
    # axis flash-style (online softmax, KV axis last + 'arbitrary') to bound the
    # (S, S) score / (S, 3D) residency on v7x's 64 MiB VMEM.
    kern = functools.partial(_attn_kernel, heads=heads, head_dim=dh,
                             scale=1.0 / math.sqrt(dh))
    stream = 2 * S * D * h.dtype.itemsize + S * 4
    resident = 3 * D * D * qkv_w.dtype.itemsize + 3 * D * 4 + S * 3 * D * 4
    return pl.pallas_call(
        kern,
        out_shape=jax.ShapeDtypeStruct((B, S, D), h.dtype),
        grid=(B,),
        in_specs=[
            pl.BlockSpec((None, S, D), lambda b: (b, 0, 0)),
            _inv_spec((D, 3 * D)),
            _inv_spec((1, 3 * D)),
            pl.BlockSpec((1, S), lambda b: (b, 0)),
        ],
        out_specs=pl.BlockSpec((None, S, D), lambda b: (b, 0, 0)),
        compiler_params=_cparams(("parallel",), stream, resident),
    )(h, qkv_w, qkv_b.reshape(1, 3 * D).astype(jnp.float32), mask_bias)


# ---------------------------------------------------------------------------
# Model glue (plain JAX: reshapes / parameter handling only)
# ---------------------------------------------------------------------------
def bert_encoder(x, attention_mask, params, cfg):
    """x: (B, S, D) inputs_embeds; attention_mask: (B, S) -> last_hidden_state."""
    B, S, D = x.shape
    H = cfg["heads"]
    # embeddings = inputs_embeds + position_emb + token_type_emb(0), then LayerNorm
    pos_tok = params["pos"][:S] + params["tok"][0]                    # (S, D) f32
    h = embed_add_layernorm(x, pos_tok, params["emb_ln_g"], params["emb_ln_b"])
    # HF extended attention mask: (1 - mask) * large_negative (kept in f32)
    mask_bias = (1.0 - attention_mask.astype(jnp.float32)) * -1e9     # (B, S)
    for lp in params["layers"]:
        ctx = attention(h, lp["qkv_w"], lp["qkv_b"], mask_bias, heads=H)   # (B,S,D)
        h2 = linear_add_layernorm(ctx.reshape(B * S, D), lp["o_w"], lp["o_b"],
                                  h.reshape(B * S, D), lp["ln1_g"], lp["ln1_b"])
        h2 = ffn_add_layernorm(h2, lp["ff1_w"], lp["ff1_b"],
                               lp["ff2_w"], lp["ff2_b"],
                               lp["ln2_g"], lp["ln2_b"])
        h = h2.reshape(B, S, D)
    return h


def encode_branch(embeddings, attention_mask, params, cfg):
    B, S, Din = embeddings.shape
    D = cfg["hidden"]
    # doc_transform_in + F.normalize(dim=2) fused into one kernel
    x = linear(embeddings.reshape(B * S, Din).astype(COMPUTE_DTYPE),
               params["in_w"], params["in_b"], l2norm_out=True)
    hc = bert_encoder(x.reshape(B, S, D), attention_mask, params, cfg)
    # F.normalize(dim=2) + doc_transform_out fused into one kernel
    out = linear(hc.reshape(B * S, D), params["out_w"], params["out_b"],
                 l2norm_in=True, out_dtype=jnp.float32)
    return out.reshape(B, S, cfg["diffusion"])


def transformer_encoder_forward(qd_emb, qd_mask, s_emb=None, s_mask=None, *,
                                params, cfg):
    qd_c = encode_branch(qd_emb, qd_mask, params, cfg)
    if s_emb is None:
        return qd_c
    s_c = encode_branch(s_emb, s_mask, params, cfg)
    return jnp.concatenate([qd_c, s_c], axis=1)


# ---------------------------------------------------------------------------
# Deterministic parameter init (synthetic, BERT-style N(0, 0.02))
# TODO(synk): loading actual HF pretrained weights is out of scope here.
# ---------------------------------------------------------------------------
def init_params(key, cfg):
    D, Din, I, L = cfg["hidden"], cfg["sent_emb_dim_in"], cfg["inter"], cfg["layers"]
    cdt = COMPUTE_DTYPE

    def w(k, fi, fo):
        return (jax.random.normal(k, (fi, fo), jnp.float32) * 0.02)

    keys = iter(jax.random.split(key, 4 + 6 * L))
    params = {
        "in_w": w(next(keys), Din, D).astype(cdt),
        "in_b": jnp.zeros((D,), jnp.float32),
        "out_w": w(next(keys), D, cfg["diffusion"]).astype(cdt),
        "out_b": jnp.zeros((cfg["diffusion"],), jnp.float32),
        "pos": jax.random.normal(next(keys), (cfg["max_pos"], D), jnp.float32) * 0.02,
        "tok": jax.random.normal(next(keys), (2, D), jnp.float32) * 0.02,
        "emb_ln_g": jnp.ones((D,), jnp.float32),
        "emb_ln_b": jnp.zeros((D,), jnp.float32),
        "layers": [],
    }
    for _ in range(L):
        wq, wk, wv = w(next(keys), D, D), w(next(keys), D, D), w(next(keys), D, D)
        params["layers"].append({
            # fused Q|K|V projection: (D, 3D), bf16 on the MXU path
            "qkv_w": jnp.concatenate([wq, wk, wv], axis=1).astype(cdt),
            "qkv_b": jnp.zeros((3 * D,), jnp.float32),
            "o_w": w(next(keys), D, D).astype(cdt),
            "o_b": jnp.zeros((D,), jnp.float32),
            "ff1_w": w(next(keys), D, I).astype(cdt),
            "ff1_b": jnp.zeros((I,), jnp.float32),
            "ff2_w": w(next(keys), I, D).astype(cdt),
            "ff2_b": jnp.zeros((D,), jnp.float32),
            "ln1_g": jnp.ones((D,), jnp.float32), "ln1_b": jnp.zeros((D,), jnp.float32),
            "ln2_g": jnp.ones((D,), jnp.float32), "ln2_b": jnp.zeros((D,), jnp.float32),
        })
    return params


if __name__ == "__main__":
    cfg = dict(sent_emb_dim_in=48, hidden=32, heads=4, inter=64, layers=2,
               diffusion=16, max_pos=32)
    key = jax.random.PRNGKey(0)
    kp, kqd, ks = jax.random.split(key, 3)
    params = init_params(kp, cfg)

    B, QD_S, S_S = 2, 8, 8
    qd_embeddings = jax.random.normal(kqd, (B, QD_S, cfg["sent_emb_dim_in"]), jnp.float32)
    s_embeddings = jax.random.normal(ks, (B, S_S, cfg["sent_emb_dim_in"]), jnp.float32)
    qd_attention_mask = jnp.array([[1, 1, 1, 1, 1, 1, 0, 0],
                                   [1, 1, 1, 1, 1, 1, 1, 1]], jnp.float32)
    s_attention_mask = jnp.array([[1, 1, 1, 1, 0, 0, 0, 0],
                                  [1, 1, 1, 1, 1, 1, 1, 0]], jnp.float32)

    out = transformer_encoder_forward(qd_embeddings, qd_attention_mask,
                                      s_embeddings, s_attention_mask,
                                      params=params, cfg=cfg)
    out = jax.block_until_ready(out)
    assert out.shape == (B, QD_S + S_S, cfg["diffusion"]), out.shape
    assert bool(jnp.all(jnp.isfinite(out)))
    print("KERNEL_OK")
</pallas_src>

<mosaic_0001>
module attributes {stable_mosaic.version = 11 : i64} {
  func.func @_linear_kernel(%arg0: i32, %arg1: memref<16x48xbf16, #tpu.memory_space<vmem>>, %arg2: memref<48x32xbf16, #tpu.memory_space<vmem>>, %arg3: memref<1x32xf32, #tpu.memory_space<vmem>>, %arg4: memref<16x32xbf16, #tpu.memory_space<vmem>>) attributes {dimension_semantics = [#tpu.dimension_semantics<parallel>], iteration_bounds = array<i64: 1>, scalar_prefetch = 0 : i64, scratch_operands = 0 : i64, tpu.core_type = #tpu.core_type<tc>, window_params = [{transform_indices = @transform_0, window_bounds = array<i64: 16, 48>}, {pipeline_mode = #tpu.pipeline_mode<synchronous>, transform_indices = @transform_1, window_bounds = array<i64: 48, 32>}, {pipeline_mode = #tpu.pipeline_mode<synchronous>, transform_indices = @transform_2, window_bounds = array<i64: 1, 32>}, {transform_indices = @transform_3, window_bounds = array<i64: 16, 32>}]} {
    %c0 = arith.constant 0 : index
    %c0_0 = arith.constant 0 : index
    %0 = vector.load %arg1[%c0, %c0_0] : memref<16x48xbf16, #tpu.memory_space<vmem>>, vector<16x48xbf16>
    %c0_1 = arith.constant 0 : index
    %c0_2 = arith.constant 0 : index
    %1 = vector.load %arg2[%c0_1, %c0_2] : memref<48x32xbf16, #tpu.memory_space<vmem>>, vector<48x32xbf16>
    %cst = arith.constant dense<0.000000e+00> : vector<16x32xf32>
    %2 = tpu.matmul %0, %1, %cst {dimension_numbers = #tpu.dot_dimension_numbers<[1], [0], [0], [1], [0, 0, 1, 1], [], []>} : vector<16x48xbf16>, vector<48x32xbf16>, vector<16x32xf32> -> vector<16x32xf32>
    %c0_3 = arith.constant 0 : index
    %c0_4 = arith.constant 0 : index
    %3 = vector.load %arg3[%c0_3, %c0_4] : memref<1x32xf32, #tpu.memory_space<vmem>>, vector<1x32xf32>
    %4 = vector.broadcast %3 : vector<1x32xf32> to vector<16x32xf32>
    %5 = arith.addf %2, %4 : vector<16x32xf32>
    %6 = arith.mulf %5, %5 : vector<16x32xf32>
    %cst_5 = arith.constant dense<0.000000e+00> : vector<16xf32>
    %7 = vector.multi_reduction <add>, %6, %cst_5 [1] : vector<16x32xf32> to vector<16xf32>
    %8 = vector.shape_cast %7 : vector<16xf32> to vector<16x1xf32>
    %9 = math.sqrt %8 : vector<16x1xf32>
    %cst_6 = arith.constant 9.99999996E-13 : f32
    %10 = vector.broadcast %cst_6 : f32 to vector<16x1xf32>
    %11 = arith.maximumf %9, %10 : vector<16x1xf32>
    %12 = vector.broadcast %11 : vector<16x1xf32> to vector<16x32xf32>
    %13 = arith.divf %5, %12 : vector<16x32xf32>
    %14 = arith.truncf %13 : vector<16x32xf32> to vector<16x32xbf16>
    %c0_7 = arith.constant 0 : index
    %c0_8 = arith.constant 0 : index
    %15 = vector.load %arg4[%c0_7, %c0_8] : memref<16x32xbf16, #tpu.memory_space<vmem>>, vector<16x32xbf16>
    tpu.vector_store %arg4[%c0_7, %c0_8], %14 {strides = array<i32>} : memref<16x32xbf16, #tpu.memory_space<vmem>>, vector<16x32xbf16>,
    return
  }
  func.func @transform_0(%arg0: i32) -> (i32, i32) {
    %c0_i32 = arith.constant 0 : i32
    %c0_i32_0 = arith.constant 0 : i32
    return %arg0, %c0_i32 : i32, i32
  }
  func.func @transform_1(%arg0: i32) -> (i32, i32) {
    %c0_i32 = arith.constant 0 : i32
    %c0_i32_0 = arith.constant 0 : i32
    %c0_i32_1 = arith.constant 0 : i32
    return %c0_i32, %c0_i32_0 : i32, i32
  }
  func.func @transform_2(%arg0: i32) -> (i32, i32) {
    %c0_i32 = arith.constant 0 : i32
    %c0_i32_0 = arith.constant 0 : i32
    %c0_i32_1 = arith.constant 0 : i32
    return %c0_i32, %c0_i32_0 : i32, i32
  }
  func.func @transform_3(%arg0: i32) -> (i32, i32) {
    %c0_i32 = arith.constant 0 : i32
    %c0_i32_0 = arith.constant 0 : i32
    return %arg0, %c0_i32 : i32, i32
  }
}

</mosaic_0001>

<llo_original>
// kernel: tpu_custom_call.1
$region0: #{tpu_custom_call.1}
  #allocation0 [shape = 'u32[]', space=smem, size = 0x4, offset = 0x4, fixed_abs, tag = 'smem constant byte address 0x4 - core index']
  #allocation1 [shape = 'u32[144,128]{1,0:T(1,128)}', space=vmem, size = 0x12000, scoped, tag = 'internal scratch']
  %s0 = inlined_call_operand.vmem [shape: bf16[16,48], index: 0, kind: input, shape index: {}]
  %s1 = inlined_call_operand.vmem [shape: bf16[48,32], index: 1, kind: input, shape index: {}]
  %s2 = inlined_call_operand.vmem [shape: f32[1,32], index: 2, kind: input, shape index: {}]
  %s3 = inlined_call_operand.hbm [shape: bf16[16,32], index: 3, kind: output, shape index: {}]
  %s4 = sld [smem:[#allocation0]]
  $region22: #{tpu_custom_call.1} parent=0
    _
  %s6 = ssub.s32 1, %s4
  %s7 = scalar_select 0, %s6, %s4
  $region1: #{tpu_custom_call.1} parent=0
    #allocation2 [shape = 'u8[4096]{0}', space=vmem, size = 0x1000, scoped, tag = 'output window, operand 0, single buffered']
    #allocation3 [shape = 's32[1]{0}', space=sflag, size = 0x4, scoped, tag = 'scoped memory for tpu_custom_call.1']
    %8 = vsyncpa [#allocation3], 0
    // Predicated region
    $region2: #{tpu_custom_call.1} parent=1 // pred_check
      _
    $region3: #{tpu_custom_call.1} parent=1 // pred_check_branch
      %10 = sbr.rel (0) target = $region5
    $region4: #{tpu_custom_call.1} parent=1 // pred_region
      _
    $region5: #{tpu_custom_call.1} parent=1 // pred_fallthru
      _
    // Predicated region
    $region6: #{tpu_custom_call.1} parent=1 // pred_check
      _
    $region7: #{tpu_custom_call.1} parent=1 // pred_check_branch
      %12 = sbr.rel (0) target = $region9
    $region8: #{tpu_custom_call.1} parent=1 // pred_region
      _
    $region9: #{tpu_custom_call.1} parent=1 // pred_fallthru
      _
    // Predicated region
    $region10: #{tpu_custom_call.1} parent=1 // pred_check
      _
    $region11: #{tpu_custom_call.1} parent=1 // pred_check_branch
      %14 = sbr.rel (0) target = $region13
    $region12: #{tpu_custom_call.1} parent=1 // pred_region
      _
    $region13: #{tpu_custom_call.1} parent=1 // pred_fallthru
      _
    %v16 = vld [vmem:[%s0] sm:$0xf]
    %v17 = vld [vmem:[%s0 + $0x4] sm:$0xf]
    %v18 = vld [vmem:[%s1] sm:$0xf]
    %v19 = vld [vmem:[%s1 + $0x4] sm:$0xf]
    %v20 = vld [vmem:[%s1 + $0x8] sm:$0xf]
    %v21 = vld [vmem:[%s1 + $0xc] sm:$0xf]
    %v22 = vld [vmem:[%s1 + $0x10] sm:$0xf]
    %v23 = vld [vmem:[%s1 + $0x14] sm:$0xf]
    %v24 = vld [vmem:[%s2] sm:$0x1]
    %v26 = vlaneseq
    %v27 = vshrl.u32 %v26, 7
    %v28 = vsub.s32 0, %v27
    %v29 = vrot.slane %v24, %v28
    %v33 = vunpack.c.l.b16 %v16
    %v34 = vunpack.c.l.b16 %v17
    %v35 = vpack.c.b16 %v34, %v33
    %v42 = vunpack.c.l.b16 %v18
    %v43 = vunpack.c.l.b16 %v19
    %v44 = vunpack.c.l.b16 %v20
    %v45 = vunpack.c.l.b16 %v21
    %v46 = vunpack.c.l.b16 %v22
    %v47 = vunpack.c.l.b16 %v23
    %v48 = vpack.c.b16 %v43, %v42
    %v49 = vpack.c.b16 %v45, %v44
    %v50 = vpack.c.b16 %v47, %v46
    %vm54 = vcmask 392192
    %v56 = vsel %vm54, %v35, 0
    %58 = vmatprep.subr.bf16.mxu0 0
    %59 = vmatpush1.bf16.msra.mxu0 0
    %60 = vmatprep.subr.bf16.mxu0 0
    %61 = vmatpush1.bf16.msra.mxu0 0
    %62 = vmatprep.subr.bf16.mxu0 0
    %63 = vmatpush1.bf16.msra.mxu0 0
    %64 = vmatprep.subr.bf16.mxu0 0
    %65 = vmatpush1.bf16.msra.mxu0 0
    %66 = vmatprep.subr.bf16.mxu0 0
    %67 = vmatpush1.bf16.msra.mxu0 0
    %68 = vmatprep.subr.bf16.mxu0 0
    %69 = vmatpush1.bf16.msra.mxu0 %v50
    %70 = vmatprep.subr.bf16.mxu0 0
    %71 = vmatpush1.bf16.msra.mxu0 %v49
    %72 = vmatprep.subr.bf16.mxu0 0
    %73 = vmatpush1.bf16.msra.mxu0 %v48
    %74 = vmatprep.subr.bf16.mxu0 0
    %75 = vmatpush2.bf16.msra.mxu0 0
    %76 = vmatprep.subr.bf16.mxu0 0
    %77 = vmatpush2.bf16.msra.mxu0 0
    %78 = vmatprep.subr.bf16.mxu0 0
    %79 = vmatpush2.bf16.msra.mxu0 0
    %80 = vmatprep.subr.bf16.mxu0 0
    %81 = vmatpush2.bf16.msra.mxu0 0
    %82 = vmatprep.subr.bf16.mxu0 0
    %83 = vmatpush2.bf16.msra.mxu0 0
    %84 = vmatprep.subr.bf16.mxu0 0
    %85 = vmatpush2.bf16.msra.mxu0 0
    %86 = vmatprep.subr.bf16.mxu0 0
    %87 = vmatpush2.bf16.msra.mxu0 0
    %88 = vmatprep.subr.bf16.mxu0 0
    %89 = vmatpush2.bf16.msra.mxu0 0
    %90 = vmatprep.mubr.bf16.mxu0 0
    %91 = vmatmul.mubr.bf16.gmra.mxu0 %v56
    %v92 = vpop.f32.mrf.mxu0
    %v93 = vadd.f32 %v29, %v92
    %v94 = vpop.f32.mrf.mxu0
    %v95 = vpop.f32.mrf.mxu0
    %v96 = vadd.f32 %v29, %v95
    %v97 = vpop.f32.mrf.mxu0
    %98 = vdwg.mxu0
    %v99 = vmul.f32 %v93, %v93
    %v100 = vmul.f32 %v96, %v96
    %vm101 = vcmask 261120
    %v102 = vsel %vm101, %v99, 0.0
    %103 = vadd.xlane.f32.xlu0 %v102
    %v104 = vpop.xlane.xlu0 %103
    %v105 = vsel %vm101, %v100, 0.0
    %106 = vadd.xlane.f32.xlu0 %v105
    %v107 = vpop.xlane.xlu0 %106
    %v108 = vrsqrt.pop %v104
    %v109 = vmul.f32 %v104, %v108
    %vm110 = vcmp.eq.f32.partialorder %v104, inf
    %v111 = vsel %vm110, %v104, %v109
    %vm112 = vcmp.eq.f32.partialorder %v104, 0.0
    %v113 = vand.u32 %v104, 2147483648
    %v114 = vsel %vm112, %v113, %v111
    %v115 = vrsqrt.pop %v107
    %v116 = vmul.f32 %v107, %v115
    %vm117 = vcmp.eq.f32.partialorder %v107, inf
    %v118 = vsel %vm117, %v107, %v116
    %vm119 = vcmp.eq.f32.partialorder %v107, 0.0
    %v120 = vand.u32 %v107, 2147483648
    %v121 = vsel %vm119, %v120, %v118
    %v122 = vmax.f32 %v114, 1e-12
    %v123 = vmax.f32 %v121, 1e-12
    %v124 = vrcp.pop %v122
    %v125 = vmul.f32 %v93, %v124
    %v126 = vrcp.pop %v123
    %v127 = vmul.f32 %v96, %v126
    %v128 = vpack.c.bf16 %v127, %v125
    %v130 = vunpack.c.l.b16 %v128
    %v131 = vunpack.c.h.b16 %v128
    %v132 = vpack.c.b16 %v130, %v130
    %v133 = vpack.c.b16 %v131, %v131
    %vm136 = vcmask 257024
    %137 = vst.msk [vmem:[#allocation2] sm:$0xf] %vm136, %v132
    %138 = vst.msk [vmem:[#allocation2 + $0x4] sm:$0xf] %vm136, %v133
    // Predicated region
    $region14: #{tpu_custom_call.1} parent=1 // pred_check
      _
    $region15: #{tpu_custom_call.1} parent=1 // pred_check_branch
      %140 = sbr.rel (0) target = $region17
    $region16: #{tpu_custom_call.1} parent=1 // pred_region
      %s142 = ssub.s32 128, 128
      %143 = vsyncadd [#allocation3], %s142
      %s144 = sshll.u32 [#allocation2], 4
      %s145 = int_to_ptr.vmem [resolvable:$true] %s144
      %150 = dma.vmem_to_hbm [thread:$0]  %s145, 128, %s3, [#allocation3], 64, 64, 4
    $region17: #{tpu_custom_call.1} parent=1 // pred_fallthru
      _
    // Predicated region
    $region18: #{tpu_custom_call.1} parent=1 // pred_check
      _
    $region19: #{tpu_custom_call.1} parent=1 // pred_check_branch
      %152 = sbr.rel (0) target = $region21
    $region20: #{tpu_custom_call.1} parent=1 // pred_region
      %153 = dma.done [#allocation3], 128
    $region21: #{tpu_custom_call.1} parent=1 // pred_fallthru
      _
    %154 = vsyncpa [#allocation3], 1

</llo_original>
